<compile_context>
chip_gen: v7x
topology: tpu7x:2x2x1
jax: 0.10.0
libtpu: 0.0.40
codegen_flags: <defaults>
</compile_context>

<pallas_src>
import jax
import jax.numpy as jnp
from jax.experimental import pallas as pl
from jax.experimental.pallas import tpu as pltpu

_LANES = 128          # lane-dense last dim
_MAX_BLOCK_ROWS = 2048  # 2048 x 128 x 4B = 1 MiB per in/out block


def _multispike_kernel(x_ref, o_ref):
    # One aligned, full-tile load and one aligned, full-tile store.
    x = x_ref[...].astype(jnp.float32)
    y = jnp.clip(4.0 * x, 0.0, 4.0)        # relu4(4*x)  (ReLUX with thre=4)
    y = jnp.floor(y + 0.5) * 0.25           # floor(.+0.5) / 4
    o_ref[...] = y.astype(o_ref.dtype)


def multispike(x, lens=4):
    """Forward pass of Multispike: floor(clamp(4*x, 0, 4) + 0.5) / 4.

    `lens` is kept for signature parity with the PyTorch module; it only
    matters for the (not implemented) surrogate backward.
    """
    del lens  # forward does not use it
    orig_shape = x.shape
    orig_dtype = x.dtype

    total = 1
    for d in orig_shape:
        total *= d

    # Flatten to a lane-dense (rows, 128) slab, padding the tail with zeros.
    rows = -(-total // _LANES)
    block_rows = min(_MAX_BLOCK_ROWS, ((rows + 7) // 8) * 8)  # multiple of 8
    padded_rows = -(-rows // block_rows) * block_rows
    total_padded = padded_rows * _LANES

    xf = jnp.ravel(x)
    if total_padded != total:
        xf = jnp.pad(xf, (0, total_padded - total))
    x2 = xf.reshape(padded_rows, _LANES)

    grid = (padded_rows // block_rows,)

    out2 = pl.pallas_call(
        _multispike_kernel,
        out_shape=jax.ShapeDtypeStruct((padded_rows, _LANES), orig_dtype),
        grid=grid,
        in_specs=[pl.BlockSpec((block_rows, _LANES), lambda i: (i, 0))],
        out_specs=pl.BlockSpec((block_rows, _LANES), lambda i: (i, 0)),
        compiler_params=pltpu.CompilerParams(
            dimension_semantics=("parallel",)),
    )(x2)

    return out2.ravel()[:total].reshape(orig_shape)


def _reference(x):
    # Pure-JAX mirror of the PyTorch forward.
    return jnp.floor(jnp.clip(4.0 * x, 0.0, 4.0) + 0.5) / 4.0


# TODO(synk): custom surrogate backward of `multispike` (grad * (0<x)*(x<lens))
# is not implemented here; this kernel covers the forward pass only.


if __name__ == "__main__":
    key = jax.random.PRNGKey(0)

    N, C, H, W = 2, 4, 16, 16
    # Spread inputs across the interesting range of the clamp (roughly [-0.5, 1.5]
    # before the internal 4x scaling).
    x = jax.random.uniform(key, (N, C, H, W), dtype=jnp.float32,
                           minval=-0.5, maxval=1.5)

    out = multispike(x, lens=4)
    out = jax.block_until_ready(out)

    ref = _reference(x)
    assert out.shape == x.shape
    assert jnp.allclose(out, ref, atol=1e-6, rtol=0.0)

    print("KERNEL_OK")
</pallas_src>

<mosaic_0001>
module attributes {stable_mosaic.version = 11 : i64} {
  func.func @_multispike_kernel(%arg0: i32, %arg1: memref<16x128xf32, #tpu.memory_space<vmem>>, %arg2: memref<16x128xf32, #tpu.memory_space<vmem>>) attributes {dimension_semantics = [#tpu.dimension_semantics<parallel>], iteration_bounds = array<i64: 1>, scalar_prefetch = 0 : i64, scratch_operands = 0 : i64, tpu.core_type = #tpu.core_type<tc>, window_params = [{transform_indices = @transform_0, window_bounds = array<i64: 16, 128>}, {transform_indices = @transform_1, window_bounds = array<i64: 16, 128>}]} {
    %c0 = arith.constant 0 : index
    %c0_0 = arith.constant 0 : index
    %0 = vector.load %arg1[%c0, %c0_0] : memref<16x128xf32, #tpu.memory_space<vmem>>, vector<16x128xf32>
    %cst = arith.constant 4.000000e+00 : f32
    %1 = vector.broadcast %cst : f32 to vector<16x128xf32>
    %2 = arith.mulf %1, %0 : vector<16x128xf32>
    %cst_1 = arith.constant 0.000000e+00 : f32
    %cst_2 = arith.constant 4.000000e+00 : f32
    %3 = vector.broadcast %cst_1 : f32 to vector<16x128xf32>
    %4 = arith.maximumf %3, %2 : vector<16x128xf32>
    %5 = vector.broadcast %cst_2 : f32 to vector<16x128xf32>
    %6 = arith.minimumf %5, %4 : vector<16x128xf32>
    %cst_3 = arith.constant 5.000000e-01 : f32
    %7 = vector.broadcast %cst_3 : f32 to vector<16x128xf32>
    %8 = arith.addf %6, %7 : vector<16x128xf32>
    %9 = math.floor %8 : vector<16x128xf32>
    %cst_4 = arith.constant 2.500000e-01 : f32
    %10 = vector.broadcast %cst_4 : f32 to vector<16x128xf32>
    %11 = arith.mulf %9, %10 : vector<16x128xf32>
    %c0_5 = arith.constant 0 : index
    %c0_6 = arith.constant 0 : index
    %12 = vector.load %arg2[%c0_5, %c0_6] : memref<16x128xf32, #tpu.memory_space<vmem>>, vector<16x128xf32>
    tpu.vector_store %arg2[%c0_5, %c0_6], %11 {strides = array<i32>} : memref<16x128xf32, #tpu.memory_space<vmem>>, vector<16x128xf32>,
    return
  }
  func.func @transform_0(%arg0: i32) -> (i32, i32) {
    %c0_i32 = arith.constant 0 : i32
    %c0_i32_0 = arith.constant 0 : i32
    return %arg0, %c0_i32 : i32, i32
  }
  func.func @transform_1(%arg0: i32) -> (i32, i32) {
    %c0_i32 = arith.constant 0 : i32
    %c0_i32_0 = arith.constant 0 : i32
    return %arg0, %c0_i32 : i32, i32
  }
}

</mosaic_0001>

<llo_original>
// kernel: tpu_custom_call.1
$region0: #{tpu_custom_call.1}
  #allocation0 [shape = 'u32[]', space=smem, size = 0x4, offset = 0x4, fixed_abs, tag = 'smem constant byte address 0x4 - core index']
  #allocation1 [shape = 'u32[144,128]{1,0:T(1,128)}', space=vmem, size = 0x12000, scoped, tag = 'internal scratch']
  %s0 = inlined_call_operand.hbm [shape: f32[16,128], index: 0, kind: input, shape index: {}]
  %s1 = inlined_call_operand.hbm [shape: f32[16,128], index: 1, kind: output, shape index: {}]
  %s2 = sld [smem:[#allocation0]]
  $region18: #{tpu_custom_call.1} parent=0
    _
  %s4 = ssub.s32 1, %s2
  %s5 = scalar_select 0, %s4, %s2
  $region1: #{tpu_custom_call.1} parent=0
    #allocation2 [shape = 'u8[8192]{0}', space=vmem, size = 0x2000, scoped, tag = 'input window, operand 0, single buffered']
    #allocation3 [shape = 's32[1]{0}', space=sflag, size = 0x4, scoped, tag = 'scoped memory for tpu_custom_call.1']
    #allocation4 [shape = 's32[1]{0}', space=sflag, size = 0x4, scoped, tag = 'scoped memory for tpu_custom_call.1']
    #allocation5 [shape = 'u8[8192]{0}', space=vmem, size = 0x2000, scoped, tag = 'output window, operand 0, single buffered']
    %6 = vsyncpa [#allocation3], 0
    %7 = vsyncpa [#allocation4], 0
    // Predicated region
    $region2: #{tpu_custom_call.1} parent=1 // pred_check
      _
    $region3: #{tpu_custom_call.1} parent=1 // pred_check_branch
      %9 = sbr.rel (0) target = $region5
    $region4: #{tpu_custom_call.1} parent=1 // pred_region
      %s11 = ssub.s32 256, 256
      %12 = vsyncadd [#allocation3], %s11
      %s13 = sshll.u32 [#allocation2], 4
      %s14 = int_to_ptr.vmem [resolvable:$true] %s13
      %19 = dma.hbm_to_vmem [thread:$0]  %s0, 256, %s14, [#allocation3], 128, 128, 8
    $region5: #{tpu_custom_call.1} parent=1 // pred_fallthru
      _
    // Predicated region
    $region6: #{tpu_custom_call.1} parent=1 // pred_check
      _
    $region7: #{tpu_custom_call.1} parent=1 // pred_check_branch
      %21 = sbr.rel (0) target = $region9
    $region8: #{tpu_custom_call.1} parent=1 // pred_region
      %22 = dma.done [#allocation3], 256
    $region9: #{tpu_custom_call.1} parent=1 // pred_fallthru
      _
    %v23 = vld [vmem:[#allocation2] sm:$0xff]
    %v24 = vld [vmem:[#allocation2 + $0x8] sm:$0xff]
    %v25 = vmul.f32 %v23, 4.0
    %v26 = vmul.f32 %v24, 4.0
    %v27 = vmax.f32 %v25, 0.0
    %v28 = vmax.f32 %v26, 0.0
    %v29 = vmin.f32 %v27, 4.0
    %v30 = vmin.f32 %v28, 4.0
    %v31 = vadd.f32 %v29, 0.5
    %v32 = vadd.f32 %v30, 0.5
    %v33 = vfloor.f32 %v31
    %v34 = vfloor.f32 %v32
    %v35 = vmul.f32 %v33, 0.25
    %v36 = vmul.f32 %v34, 0.25
    %37 = vst [vmem:[#allocation5] sm:$0xff] %v35
    %38 = vst [vmem:[#allocation5 + $0x8] sm:$0xff] %v36
    // Predicated region
    $region10: #{tpu_custom_call.1} parent=1 // pred_check
      _
    $region11: #{tpu_custom_call.1} parent=1 // pred_check_branch
      %40 = sbr.rel (0) target = $region13
    $region12: #{tpu_custom_call.1} parent=1 // pred_region
      %s42 = ssub.s32 256, 256
      %43 = vsyncadd [#allocation4], %s42
      %s44 = sshll.u32 [#allocation5], 4
      %s45 = int_to_ptr.vmem [resolvable:$true] %s44
      %50 = dma.vmem_to_hbm [thread:$0]  %s45, 256, %s1, [#allocation4], 128, 128, 8
    $region13: #{tpu_custom_call.1} parent=1 // pred_fallthru
      _
    // Predicated region
    $region14: #{tpu_custom_call.1} parent=1 // pred_check
      _
    $region15: #{tpu_custom_call.1} parent=1 // pred_check_branch
      %52 = sbr.rel (0) target = $region17
    $region16: #{tpu_custom_call.1} parent=1 // pred_region
      %53 = dma.done [#allocation4], 256
    $region17: #{tpu_custom_call.1} parent=1 // pred_fallthru
      _
    %54 = vsyncpa [#allocation3], 1
    %55 = vsyncpa [#allocation4], 1

</llo_original>
